<compile_context>
chip_gen: v7x
topology: tpu7x:2x2x1
jax: 0.10.0
libtpu: 0.0.40
codegen_flags: <defaults>
</compile_context>

<pallas_src>
import jax
import jax.numpy as jnp
from jax.experimental import pallas as pl
from jax.experimental.pallas import tpu as pltpu


def _backbone_kernel(x_ref, w_ref, b_ref, o_ref):
    # x_ref: (bt*C, HW)        one row per (batch, channel), spatial in lanes
    # w_ref: (C, HIDDEN, CHK)  1x1-conv weight, pre-broadcast over the lane dim
    # b_ref: (HIDDEN, CHK)     bias, pre-broadcast over the lane dim
    # o_ref: (bt, HIDDEN)      pooled features for this batch block
    C, hidden, chk = w_ref.shape
    bt = o_ref.shape[0]
    HW = x_ref.shape[1]
    n_chunks = HW // chk
    inv_hw = 1.0 / HW

    # Static unroll over batch rows / spatial chunks keeps the live set small
    # (one (HIDDEN, CHK) accumulator = 4 vregs at HIDDEN=32, CHK=128); each
    # row's pooled result is stored before the next row starts, so the kernel
    # stays VALU-bound instead of spilling.
    for b in range(bt):
        pooled = jnp.zeros((hidden,), dtype=jnp.float32)
        for j in range(n_chunks):
            lo = j * chk
            acc = b_ref[...]                            # start pre-act from bias
            for c in range(C):                          # tiny K: VPU broadcast-FMA
                xc = x_ref[b * C + c, lo:lo + chk]      # (CHK,) lane vector
                acc = acc + w_ref[c] * xc               # bcast over HIDDEN sublanes
            # ReLU + partial spatial (lane-axis) sum for this chunk
            pooled = pooled + jnp.sum(jnp.maximum(acc, 0.0), axis=-1)
        o_ref[b, :] = (pooled * inv_hw).astype(o_ref.dtype)


def _pick_batch_block(n, c, hw, target):
    """Largest bt <= target that divides n, keeps TPU-friendly block shapes
    (bt and bt*C multiples of 8, unless the block covers the full batch) and
    fits a conservative double-buffered x-tile VMEM budget."""
    vmem_budget = 8 * 1024 * 1024                       # safe on v5e/v6e/v7x
    bytes_per_batch_row = c * hw * 4
    cap = max(1, vmem_budget // (2 * bytes_per_batch_row))
    target = max(1, min(target, cap, n))
    best = None
    for bt in range(1, target + 1):
        if n % bt == 0 and (bt % 8 == 0 or bt == n):
            best = bt
    # Fallback: full batch in one block (block dims == array dims is always legal).
    return best if best is not None else n


def downstream_forward(x_nchw, w_conv, b_conv, *, batch_block=None):
    """x_nchw: (N, C, H, W) f32; w_conv: (HIDDEN, C, 1, 1); b_conv: (HIDDEN,)."""
    N, C, H, W = x_nchw.shape
    HIDDEN = w_conv.shape[0]
    HW = H * W

    # Lane-dense spatial chunk processed per inner-loop iteration.
    chk = 128 if HW % 128 == 0 else HW

    target = 32 if batch_block is None else batch_block
    bt = _pick_batch_block(N, C, HW, target)
    grid = (N // bt,)

    # FREE reshape of contiguous NCHW: one row per (batch, channel).
    x2 = x_nchw.reshape(N * C, HW)
    # One-off lane-dense weight / bias slabs (~(C+1)*HIDDEN*chk*4 bytes).
    w_cd = jnp.transpose(w_conv.reshape(HIDDEN, C))                     # (C, HIDDEN)
    w_b = jnp.broadcast_to(w_cd[:, :, None], (C, HIDDEN, chk)).astype(x_nchw.dtype)
    b_b = jnp.broadcast_to(b_conv[:, None], (HIDDEN, chk)).astype(x_nchw.dtype)

    pooled = pl.pallas_call(
        _backbone_kernel,
        out_shape=jax.ShapeDtypeStruct((N, HIDDEN), x_nchw.dtype),
        grid_spec=pltpu.PrefetchScalarGridSpec(
            num_scalar_prefetch=0,
            grid=grid,
            in_specs=[
                pl.BlockSpec((bt * C, HW), lambda i: (i, 0)),
                pl.BlockSpec((C, HIDDEN, chk), lambda i: (0, 0, 0)),
                pl.BlockSpec((HIDDEN, chk), lambda i: (0, 0)),
            ],
            out_specs=pl.BlockSpec((bt, HIDDEN), lambda i: (i, 0)),
        ),
        compiler_params=pltpu.CompilerParams(
            # Batch-block axis is independent -> shard across TensorCores (v7x).
            dimension_semantics=("parallel",),
            # Explicit cap: generous vs. our <1 MiB/step footprint, well inside
            # v5e's 16 MiB scoped default headroom and v7x's 64 MiB physical VMEM.
            vmem_limit_bytes=32 * 1024 * 1024,
        ),
    )(x2, w_b, b_b)

    # backbone output is conceptually (N, HIDDEN, 1, 1); torch .squeeze() drops
    # ALL size-1 dims (including batch when N == 1).  jnp.squeeze matches that
    # exactly — documented shape footgun for N == 1.
    return jnp.squeeze(pooled)


def _reference(x_nchw, w_conv, b_conv):
    # Pure-JAX reference for correctness checking.
    N, C, H, W = x_nchw.shape
    HIDDEN = w_conv.shape[0]
    x_flat = jnp.transpose(x_nchw, (0, 2, 3, 1)).reshape(N, H * W, C)
    y = x_flat @ w_conv.reshape(HIDDEN, C).T + b_conv[None, None, :]
    y = jnp.maximum(y, 0.0)
    return jnp.squeeze(jnp.mean(y, axis=1))


if __name__ == "__main__":
    key = jax.random.PRNGKey(0)
    k_x, k_w, k_b, k_x2 = jax.random.split(key, 4)

    # Small shapes implied by the module: batch=2, channels=4, spatial 16x16, hidden=32.
    N, C, H, W = 2, 4, 16, 16
    HIDDEN = 32

    x = jax.random.normal(k_x, (N, C, H, W), dtype=jnp.float32)
    w_conv = jax.random.normal(k_w, (HIDDEN, C, 1, 1), dtype=jnp.float32) * 0.1
    b_conv = jax.random.normal(k_b, (HIDDEN,), dtype=jnp.float32) * 0.01

    out = downstream_forward(x, w_conv, b_conv)
    jax.block_until_ready(out)
    ref = _reference(x, w_conv, b_conv)
    assert out.shape == ref.shape == (N, HIDDEN), (out.shape, ref.shape)
    assert jnp.allclose(out, ref, atol=1e-5, rtol=1e-5), "mismatch vs reference"

    # Also exercise the multi-step (pipelined / dual-TC-shardable) grid path.
    N2 = 16
    x_big = jax.random.normal(k_x2, (N2, C, H, W), dtype=jnp.float32)
    out_big = downstream_forward(x_big, w_conv, b_conv, batch_block=8)   # grid=(2,)
    jax.block_until_ready(out_big)
    ref_big = _reference(x_big, w_conv, b_conv)
    assert out_big.shape == ref_big.shape == (N2, HIDDEN), (out_big.shape, ref_big.shape)
    assert jnp.allclose(out_big, ref_big, atol=1e-5, rtol=1e-5), "mismatch (multi-block)"

    print("KERNEL_OK")
</pallas_src>

<mosaic_0001>
module attributes {stable_mosaic.version = 11 : i64} {
  func.func @_backbone_kernel(%arg0: i32, %arg1: memref<8x256xf32, #tpu.memory_space<vmem>>, %arg2: memref<4x32x128xf32, #tpu.memory_space<vmem>>, %arg3: memref<32x128xf32, #tpu.memory_space<vmem>>, %arg4: memref<2x32xf32, #tpu.memory_space<vmem>>) attributes {dimension_semantics = [#tpu.dimension_semantics<parallel>], iteration_bounds = array<i64: 1>, scalar_prefetch = 0 : i64, scratch_operands = 0 : i64, tpu.core_type = #tpu.core_type<tc>, window_params = [{transform_indices = @transform_0, window_bounds = array<i64: 8, 256>}, {pipeline_mode = #tpu.pipeline_mode<synchronous>, transform_indices = @transform_1, window_bounds = array<i64: 4, 32, 128>}, {pipeline_mode = #tpu.pipeline_mode<synchronous>, transform_indices = @transform_2, window_bounds = array<i64: 32, 128>}, {transform_indices = @transform_3, window_bounds = array<i64: 2, 32>}]} {
    %cst = arith.constant 0.000000e+00 : f32
    %0 = vector.broadcast %cst : f32 to vector<32xf32>
    %c0 = arith.constant 0 : index
    %c0_0 = arith.constant 0 : index
    %1 = vector.load %arg3[%c0, %c0_0] : memref<32x128xf32, #tpu.memory_space<vmem>>, vector<32x128xf32>
    %c0_1 = arith.constant 0 : index
    %c0_2 = arith.constant 0 : index
    %2 = vector.load %arg1[%c0_1, %c0_2] : memref<8x256xf32, #tpu.memory_space<vmem>>, vector<1x128xf32>
    %3 = vector.shape_cast %2 : vector<1x128xf32> to vector<128xf32>
    %c0_3 = arith.constant 0 : index
    %c0_4 = arith.constant 0 : index
    %c0_5 = arith.constant 0 : index
    %4 = vector.load %arg2[%c0_3, %c0_4, %c0_5] : memref<4x32x128xf32, #tpu.memory_space<vmem>>, vector<1x32x128xf32>
    %5 = vector.shape_cast %4 : vector<1x32x128xf32> to vector<32x128xf32>
    %6 = vector.shape_cast %3 : vector<128xf32> to vector<1x128xf32>
    %7 = vector.broadcast %6 : vector<1x128xf32> to vector<32x128xf32>
    %8 = arith.mulf %5, %7 : vector<32x128xf32>
    %9 = arith.addf %1, %8 : vector<32x128xf32>
    %c1 = arith.constant 1 : index
    %c0_6 = arith.constant 0 : index
    %10 = vector.load %arg1[%c1, %c0_6] : memref<8x256xf32, #tpu.memory_space<vmem>>, vector<1x128xf32>
    %11 = vector.shape_cast %10 : vector<1x128xf32> to vector<128xf32>
    %c1_7 = arith.constant 1 : index
    %c0_8 = arith.constant 0 : index
    %c0_9 = arith.constant 0 : index
    %12 = vector.load %arg2[%c1_7, %c0_8, %c0_9] : memref<4x32x128xf32, #tpu.memory_space<vmem>>, vector<1x32x128xf32>
    %13 = vector.shape_cast %12 : vector<1x32x128xf32> to vector<32x128xf32>
    %14 = vector.shape_cast %11 : vector<128xf32> to vector<1x128xf32>
    %15 = vector.broadcast %14 : vector<1x128xf32> to vector<32x128xf32>
    %16 = arith.mulf %13, %15 : vector<32x128xf32>
    %17 = arith.addf %9, %16 : vector<32x128xf32>
    %c2 = arith.constant 2 : index
    %c0_10 = arith.constant 0 : index
    %18 = vector.load %arg1[%c2, %c0_10] : memref<8x256xf32, #tpu.memory_space<vmem>>, vector<1x128xf32>
    %19 = vector.shape_cast %18 : vector<1x128xf32> to vector<128xf32>
    %c2_11 = arith.constant 2 : index
    %c0_12 = arith.constant 0 : index
    %c0_13 = arith.constant 0 : index
    %20 = vector.load %arg2[%c2_11, %c0_12, %c0_13] : memref<4x32x128xf32, #tpu.memory_space<vmem>>, vector<1x32x128xf32>
    %21 = vector.shape_cast %20 : vector<1x32x128xf32> to vector<32x128xf32>
    %22 = vector.shape_cast %19 : vector<128xf32> to vector<1x128xf32>
    %23 = vector.broadcast %22 : vector<1x128xf32> to vector<32x128xf32>
    %24 = arith.mulf %21, %23 : vector<32x128xf32>
    %25 = arith.addf %17, %24 : vector<32x128xf32>
    %c3 = arith.constant 3 : index
    %c0_14 = arith.constant 0 : index
    %26 = vector.load %arg1[%c3, %c0_14] : memref<8x256xf32, #tpu.memory_space<vmem>>, vector<1x128xf32>
    %27 = vector.shape_cast %26 : vector<1x128xf32> to vector<128xf32>
    %c3_15 = arith.constant 3 : index
    %c0_16 = arith.constant 0 : index
    %c0_17 = arith.constant 0 : index
    %28 = vector.load %arg2[%c3_15, %c0_16, %c0_17] : memref<4x32x128xf32, #tpu.memory_space<vmem>>, vector<1x32x128xf32>
    %29 = vector.shape_cast %28 : vector<1x32x128xf32> to vector<32x128xf32>
    %30 = vector.shape_cast %27 : vector<128xf32> to vector<1x128xf32>
    %31 = vector.broadcast %30 : vector<1x128xf32> to vector<32x128xf32>
    %32 = arith.mulf %29, %31 : vector<32x128xf32>
    %33 = arith.addf %25, %32 : vector<32x128xf32>
    %cst_18 = arith.constant 0.000000e+00 : f32
    %34 = vector.broadcast %cst_18 : f32 to vector<32x128xf32>
    %35 = arith.maximumf %33, %34 : vector<32x128xf32>
    %cst_19 = arith.constant dense<0.000000e+00> : vector<32xf32>
    %36 = vector.multi_reduction <add>, %35, %cst_19 [1] : vector<32x128xf32> to vector<32xf32>
    %37 = arith.addf %0, %36 : vector<32xf32>
    %c0_20 = arith.constant 0 : index
    %c0_21 = arith.constant 0 : index
    %38 = vector.load %arg3[%c0_20, %c0_21] : memref<32x128xf32, #tpu.memory_space<vmem>>, vector<32x128xf32>
    %c0_22 = arith.constant 0 : index
    %c128 = arith.constant 128 : index
    %39 = vector.load %arg1[%c0_22, %c128] : memref<8x256xf32, #tpu.memory_space<vmem>>, vector<1x128xf32>
    %40 = vector.shape_cast %39 : vector<1x128xf32> to vector<128xf32>
    %c0_23 = arith.constant 0 : index
    %c0_24 = arith.constant 0 : index
    %c0_25 = arith.constant 0 : index
    %41 = vector.load %arg2[%c0_23, %c0_24, %c0_25] : memref<4x32x128xf32, #tpu.memory_space<vmem>>, vector<1x32x128xf32>
    %42 = vector.shape_cast %41 : vector<1x32x128xf32> to vector<32x128xf32>
    %43 = vector.shape_cast %40 : vector<128xf32> to vector<1x128xf32>
    %44 = vector.broadcast %43 : vector<1x128xf32> to vector<32x128xf32>
    %45 = arith.mulf %42, %44 : vector<32x128xf32>
    %46 = arith.addf %38, %45 : vector<32x128xf32>
    %c1_26 = arith.constant 1 : index
    %c128_27 = arith.constant 128 : index
    %47 = vector.load %arg1[%c1_26, %c128_27] : memref<8x256xf32, #tpu.memory_space<vmem>>, vector<1x128xf32>
    %48 = vector.shape_cast %47 : vector<1x128xf32> to vector<128xf32>
    %c1_28 = arith.constant 1 : index
    %c0_29 = arith.constant 0 : index
    %c0_30 = arith.constant 0 : index
    %49 = vector.load %arg2[%c1_28, %c0_29, %c0_30] : memref<4x32x128xf32, #tpu.memory_space<vmem>>, vector<1x32x128xf32>
    %50 = vector.shape_cast %49 : vector<1x32x128xf32> to vector<32x128xf32>
    %51 = vector.shape_cast %48 : vector<128xf32> to vector<1x128xf32>
    %52 = vector.broadcast %51 : vector<1x128xf32> to vector<32x128xf32>
    %53 = arith.mulf %50, %52 : vector<32x128xf32>
    %54 = arith.addf %46, %53 : vector<32x128xf32>
    %c2_31 = arith.constant 2 : index
    %c128_32 = arith.constant 128 : index
    %55 = vector.load %arg1[%c2_31, %c128_32] : memref<8x256xf32, #tpu.memory_space<vmem>>, vector<1x128xf32>
    %56 = vector.shape_cast %55 : vector<1x128xf32> to vector<128xf32>
    %c2_33 = arith.constant 2 : index
    %c0_34 = arith.constant 0 : index
    %c0_35 = arith.constant 0 : index
    %57 = vector.load %arg2[%c2_33, %c0_34, %c0_35] : memref<4x32x128xf32, #tpu.memory_space<vmem>>, vector<1x32x128xf32>
    %58 = vector.shape_cast %57 : vector<1x32x128xf32> to vector<32x128xf32>
    %59 = vector.shape_cast %56 : vector<128xf32> to vector<1x128xf32>
    %60 = vector.broadcast %59 : vector<1x128xf32> to vector<32x128xf32>
    %61 = arith.mulf %58, %60 : vector<32x128xf32>
    %62 = arith.addf %54, %61 : vector<32x128xf32>
    %c3_36 = arith.constant 3 : index
    %c128_37 = arith.constant 128 : index
    %63 = vector.load %arg1[%c3_36, %c128_37] : memref<8x256xf32, #tpu.memory_space<vmem>>, vector<1x128xf32>
    %64 = vector.shape_cast %63 : vector<1x128xf32> to vector<128xf32>
    %c3_38 = arith.constant 3 : index
    %c0_39 = arith.constant 0 : index
    %c0_40 = arith.constant 0 : index
    %65 = vector.load %arg2[%c3_38, %c0_39, %c0_40] : memref<4x32x128xf32, #tpu.memory_space<vmem>>, vector<1x32x128xf32>
    %66 = vector.shape_cast %65 : vector<1x32x128xf32> to vector<32x128xf32>
    %67 = vector.shape_cast %64 : vector<128xf32> to vector<1x128xf32>
    %68 = vector.broadcast %67 : vector<1x128xf32> to vector<32x128xf32>
    %69 = arith.mulf %66, %68 : vector<32x128xf32>
    %70 = arith.addf %62, %69 : vector<32x128xf32>
    %cst_41 = arith.constant 0.000000e+00 : f32
    %71 = vector.broadcast %cst_41 : f32 to vector<32x128xf32>
    %72 = arith.maximumf %70, %71 : vector<32x128xf32>
    %cst_42 = arith.constant dense<0.000000e+00> : vector<32xf32>
    %73 = vector.multi_reduction <add>, %72, %cst_42 [1] : vector<32x128xf32> to vector<32xf32>
    %74 = arith.addf %37, %73 : vector<32xf32>
    %cst_43 = arith.constant 3.906250e-03 : f32
    %75 = vector.broadcast %cst_43 : f32 to vector<32xf32>
    %76 = arith.mulf %74, %75 : vector<32xf32>
    %c0_44 = arith.constant 0 : index
    %c0_45 = arith.constant 0 : index
    %77 = vector.load %arg4[%c0_44, %c0_45] : memref<2x32xf32, #tpu.memory_space<vmem>>, vector<1x32xf32>
    %78 = vector.shape_cast %77 : vector<1x32xf32> to vector<32xf32>
    %79 = vector.shape_cast %76 : vector<32xf32> to vector<1x32xf32>
    tpu.vector_store %arg4[%c0_44, %c0_45], %79 {strides = array<i32>} : memref<2x32xf32, #tpu.memory_space<vmem>>, vector<1x32xf32>,
    %cst_46 = arith.constant 0.000000e+00 : f32
    %80 = vector.broadcast %cst_46 : f32 to vector<32xf32>
    %c0_47 = arith.constant 0 : index
    %c0_48 = arith.constant 0 : index
    %81 = vector.load %arg3[%c0_47, %c0_48] : memref<32x128xf32, #tpu.memory_space<vmem>>, vector<32x128xf32>
    %c4 = arith.constant 4 : index
    %c0_49 = arith.constant 0 : index
    %82 = vector.load %arg1[%c4, %c0_49] : memref<8x256xf32, #tpu.memory_space<vmem>>, vector<1x128xf32>
    %83 = vector.shape_cast %82 : vector<1x128xf32> to vector<128xf32>
    %c0_50 = arith.constant 0 : index
    %c0_51 = arith.constant 0 : index
    %c0_52 = arith.constant 0 : index
    %84 = vector.load %arg2[%c0_50, %c0_51, %c0_52] : memref<4x32x128xf32, #tpu.memory_space<vmem>>, vector<1x32x128xf32>
    %85 = vector.shape_cast %84 : vector<1x32x128xf32> to vector<32x128xf32>
    %86 = vector.shape_cast %83 : vector<128xf32> to vector<1x128xf32>
    %87 = vector.broadcast %86 : vector<1x128xf32> to vector<32x128xf32>
    %88 = arith.mulf %85, %87 : vector<32x128xf32>
    %89 = arith.addf %81, %88 : vector<32x128xf32>
    %c5 = arith.constant 5 : index
    %c0_53 = arith.constant 0 : index
    %90 = vector.load %arg1[%c5, %c0_53] : memref<8x256xf32, #tpu.memory_space<vmem>>, vector<1x128xf32>
    %91 = vector.shape_cast %90 : vector<1x128xf32> to vector<128xf32>
    %c1_54 = arith.constant 1 : index
    %c0_55 = arith.constant 0 : index
    %c0_56 = arith.constant 0 : index
    %92 = vector.load %arg2[%c1_54, %c0_55, %c0_56] : memref<4x32x128xf32, #tpu.memory_space<vmem>>, vector<1x32x128xf32>
    %93 = vector.shape_cast %92 : vector<1x32x128xf32> to vector<32x128xf32>
    %94 = vector.shape_cast %91 : vector<128xf32> to vector<1x128xf32>
    %95 = vector.broadcast %94 : vector<1x128xf32> to vector<32x128xf32>
    %96 = arith.mulf %93, %95 : vector<32x128xf32>
    %97 = arith.addf %89, %96 : vector<32x128xf32>
    %c6 = arith.constant 6 : index
    %c0_57 = arith.constant 0 : index
    %98 = vector.load %arg1[%c6, %c0_57] : memref<8x256xf32, #tpu.memory_space<vmem>>, vector<1x128xf32>
    %99 = vector.shape_cast %98 : vector<1x128xf32> to vector<128xf32>
    %c2_58 = arith.constant 2 : index
    %c0_59 = arith.constant 0 : index
    %c0_60 = arith.constant 0 : index
    %100 = vector.load %arg2[%c2_58, %c0_59, %c0_60] : memref<4x32x128xf32, #tpu.memory_space<vmem>>, vector<1x32x128xf32>
    %101 = vector.shape_cast %100 : vector<1x32x128xf32> to vector<32x128xf32>
    %102 = vector.shape_cast %99 : vector<128xf32> to vector<1x128xf32>
    %103 = vector.broadcast %102 : vector<1x128xf32> to vector<32x128xf32>
    %104 = arith.mulf %101, %103 : vector<32x128xf32>
    %105 = arith.addf %97, %104 : vector<32x128xf32>
    %c7 = arith.constant 7 : index
    %c0_61 = arith.constant 0 : index
    %106 = vector.load %arg1[%c7, %c0_61] : memref<8x256xf32, #tpu.memory_space<vmem>>, vector<1x128xf32>
    %107 = vector.shape_cast %106 : vector<1x128xf32> to vector<128xf32>
    %c3_62 = arith.constant 3 : index
    %c0_63 = arith.constant 0 : index
    %c0_64 = arith.constant 0 : index
    %108 = vector.load %arg2[%c3_62, %c0_63, %c0_64] : memref<4x32x128xf32, #tpu.memory_space<vmem>>, vector<1x32x128xf32>
    %109 = vector.shape_cast %108 : vector<1x32x128xf32> to vector<32x128xf32>
    %110 = vector.shape_cast %107 : vector<128xf32> to vector<1x128xf32>
    %111 = vector.broadcast %110 : vector<1x128xf32> to vector<32x128xf32>
    %112 = arith.mulf %109, %111 : vector<32x128xf32>
    %113 = arith.addf %105, %112 : vector<32x128xf32>
    %cst_65 = arith.constant 0.000000e+00 : f32
    %114 = vector.broadcast %cst_65 : f32 to vector<32x128xf32>
    %115 = arith.maximumf %113, %114 : vector<32x128xf32>
    %cst_66 = arith.constant dense<0.000000e+00> : vector<32xf32>
    %116 = vector.multi_reduction <add>, %115, %cst_66 [1] : vector<32x128xf32> to vector<32xf32>
    %117 = arith.addf %80, %116 : vector<32xf32>
    %c0_67 = arith.constant 0 : index
    %c0_68 = arith.constant 0 : index
    %118 = vector.load %arg3[%c0_67, %c0_68] : memref<32x128xf32, #tpu.memory_space<vmem>>, vector<32x128xf32>
    %c4_69 = arith.constant 4 : index
    %c128_70 = arith.constant 128 : index
    %119 = vector.load %arg1[%c4_69, %c128_70] : memref<8x256xf32, #tpu.memory_space<vmem>>, vector<1x128xf32>
    %120 = vector.shape_cast %119 : vector<1x128xf32> to vector<128xf32>
    %c0_71 = arith.constant 0 : index
    %c0_72 = arith.constant 0 : index
    %c0_73 = arith.constant 0 : index
    %121 = vector.load %arg2[%c0_71, %c0_72, %c0_73] : memref<4x32x128xf32, #tpu.memory_space<vmem>>, vector<1x32x128xf32>
    %122 = vector.shape_cast %121 : vector<1x32x128xf32> to vector<32x128xf32>
    %123 = vector.shape_cast %120 : vector<128xf32> to vector<1x128xf32>
    %124 = vector.broadcast %123 : vector<1x128xf32> to vector<32x128xf32>
    %125 = arith.mulf %122, %124 : vector<32x128xf32>
    %126 = arith.addf %118, %125 : vector<32x128xf32>
    %c5_74 = arith.constant 5 : index
    %c128_75 = arith.constant 128 : index
    %127 = vector.load %arg1[%c5_74, %c128_75] : memref<8x256xf32, #tpu.memory_space<vmem>>, vector<1x128xf32>
    %128 = vector.shape_cast %127 : vector<1x128xf32> to vector<128xf32>
    %c1_76 = arith.constant 1 : index
    %c0_77 = arith.constant 0 : index
    %c0_78 = arith.constant 0 : index
    %129 = vector.load %arg2[%c1_76, %c0_77, %c0_78] : memref<4x32x128xf32, #tpu.memory_space<vmem>>, vector<1x32x128xf32>
    %130 = vector.shape_cast %129 : vector<1x32x128xf32> to vector<32x128xf32>
    %131 = vector.shape_cast %128 : vector<128xf32> to vector<1x128xf32>
    %132 = vector.broadcast %131 : vector<1x128xf32> to vector<32x128xf32>
    %133 = arith.mulf %130, %132 : vector<32x128xf32>
    %134 = arith.addf %126, %133 : vector<32x128xf32>
    %c6_79 = arith.constant 6 : index
    %c128_80 = arith.constant 128 : index
    %135 = vector.load %arg1[%c6_79, %c128_80] : memref<8x256xf32, #tpu.memory_space<vmem>>, vector<1x128xf32>
    %136 = vector.shape_cast %135 : vector<1x128xf32> to vector<128xf32>
    %c2_81 = arith.constant 2 : index
    %c0_82 = arith.constant 0 : index
    %c0_83 = arith.constant 0 : index
    %137 = vector.load %arg2[%c2_81, %c0_82, %c0_83] : memref<4x32x128xf32, #tpu.memory_space<vmem>>, vector<1x32x128xf32>
    %138 = vector.shape_cast %137 : vector<1x32x128xf32> to vector<32x128xf32>
    %139 = vector.shape_cast %136 : vector<128xf32> to vector<1x128xf32>
    %140 = vector.broadcast %139 : vector<1x128xf32> to vector<32x128xf32>
    %141 = arith.mulf %138, %140 : vector<32x128xf32>
    %142 = arith.addf %134, %141 : vector<32x128xf32>
    %c7_84 = arith.constant 7 : index
    %c128_85 = arith.constant 128 : index
    %143 = vector.load %arg1[%c7_84, %c128_85] : memref<8x256xf32, #tpu.memory_space<vmem>>, vector<1x128xf32>
    %144 = vector.shape_cast %143 : vector<1x128xf32> to vector<128xf32>
    %c3_86 = arith.constant 3 : index
    %c0_87 = arith.constant 0 : index
    %c0_88 = arith.constant 0 : index
    %145 = vector.load %arg2[%c3_86, %c0_87, %c0_88] : memref<4x32x128xf32, #tpu.memory_space<vmem>>, vector<1x32x128xf32>
    %146 = vector.shape_cast %145 : vector<1x32x128xf32> to vector<32x128xf32>
    %147 = vector.shape_cast %144 : vector<128xf32> to vector<1x128xf32>
    %148 = vector.broadcast %147 : vector<1x128xf32> to vector<32x128xf32>
    %149 = arith.mulf %146, %148 : vector<32x128xf32>
    %150 = arith.addf %142, %149 : vector<32x128xf32>
    %cst_89 = arith.constant 0.000000e+00 : f32
    %151 = vector.broadcast %cst_89 : f32 to vector<32x128xf32>
    %152 = arith.maximumf %150, %151 : vector<32x128xf32>
    %cst_90 = arith.constant dense<0.000000e+00> : vector<32xf32>
    %153 = vector.multi_reduction <add>, %152, %cst_90 [1] : vector<32x128xf32> to vector<32xf32>
    %154 = arith.addf %117, %153 : vector<32xf32>
    %cst_91 = arith.constant 3.906250e-03 : f32
    %155 = vector.broadcast %cst_91 : f32 to vector<32xf32>
    %156 = arith.mulf %154, %155 : vector<32xf32>
    %c1_92 = arith.constant 1 : index
    %c0_93 = arith.constant 0 : index
    %157 = vector.load %arg4[%c1_92, %c0_93] : memref<2x32xf32, #tpu.memory_space<vmem>>, vector<1x32xf32>
    %158 = vector.shape_cast %157 : vector<1x32xf32> to vector<32xf32>
    %159 = vector.shape_cast %156 : vector<32xf32> to vector<1x32xf32>
    tpu.vector_store %arg4[%c1_92, %c0_93], %159 {strides = array<i32>} : memref<2x32xf32, #tpu.memory_space<vmem>>, vector<1x32xf32>,
    return
  }
  func.func @transform_0(%arg0: i32) -> (i32, i32) {
    %c0_i32 = arith.constant 0 : i32
    %c0_i32_0 = arith.constant 0 : i32
    return %arg0, %c0_i32 : i32, i32
  }
  func.func @transform_1(%arg0: i32) -> (i32, i32, i32) {
    %c0_i32 = arith.constant 0 : i32
    %c0_i32_0 = arith.constant 0 : i32
    %c0_i32_1 = arith.constant 0 : i32
    %c0_i32_2 = arith.constant 0 : i32
    return %c0_i32, %c0_i32_0, %c0_i32_1 : i32, i32, i32
  }
  func.func @transform_2(%arg0: i32) -> (i32, i32) {
    %c0_i32 = arith.constant 0 : i32
    %c0_i32_0 = arith.constant 0 : i32
    %c0_i32_1 = arith.constant 0 : i32
    return %c0_i32, %c0_i32_0 : i32, i32
  }
  func.func @transform_3(%arg0: i32) -> (i32, i32) {
    %c0_i32 = arith.constant 0 : i32
    %c0_i32_0 = arith.constant 0 : i32
    return %arg0, %c0_i32 : i32, i32
  }
}

</mosaic_0001>

<llo_original>
// kernel: tpu_custom_call.1
$region0: #{tpu_custom_call.1}
  #allocation0 [shape = 'u32[]', space=smem, size = 0x4, offset = 0x4, fixed_abs, tag = 'smem constant byte address 0x4 - core index']
  #allocation1 [shape = 'u32[144,128]{1,0:T(1,128)}', space=vmem, size = 0x12000, scoped, tag = 'internal scratch']
  %s0 = inlined_call_operand.hbm [shape: f32[8,256], index: 0, kind: input, shape index: {}]
  %s1 = inlined_call_operand.hbm [shape: f32[4,32,128], index: 1, kind: input, shape index: {}]
  %s2 = inlined_call_operand.hbm [shape: f32[32,128], index: 2, kind: input, shape index: {}]
  %s3 = inlined_call_operand.hbm [shape: f32[2,32], index: 3, kind: output, shape index: {}]
  %s4 = sld [smem:[#allocation0]]
  $region34: #{tpu_custom_call.1} parent=0
    _
  %s6 = ssub.s32 1, %s4
  %s7 = scalar_select 0, %s6, %s4
  $region1: #{tpu_custom_call.1} parent=0
    #allocation2 [shape = 'u8[8192]{0}', space=vmem, size = 0x2000, scoped, tag = 'input window, operand 0, single buffered']
    #allocation3 [shape = 's32[1]{0}', space=sflag, size = 0x4, scoped, tag = 'scoped memory for tpu_custom_call.1']
    #allocation4 [shape = 's32[1]{0}', space=sflag, size = 0x4, scoped, tag = 'scoped memory for tpu_custom_call.1']
    #allocation5 [shape = 'u8[65536]{0}', space=vmem, size = 0x10000, scoped, tag = 'input window, operand 1, single buffered']
    #allocation6 [shape = 's32[1]{0}', space=sflag, size = 0x4, scoped, tag = 'scoped memory for tpu_custom_call.1']
    #allocation7 [shape = 'u8[16384]{0}', space=vmem, size = 0x4000, scoped, tag = 'input window, operand 2, single buffered']
    #allocation8 [shape = 'u8[1024]{0}', space=vmem, size = 0x400, scoped, tag = 'output window, operand 0, single buffered']
    %8 = vsyncpa [#allocation3], 0
    %9 = vsyncpa [#allocation6], 0
    %10 = vsyncpa [#allocation4], 0
    // Predicated region
    $region2: #{tpu_custom_call.1} parent=1 // pred_check
      _
    $region3: #{tpu_custom_call.1} parent=1 // pred_check_branch
      %12 = sbr.rel (0) target = $region5
    $region4: #{tpu_custom_call.1} parent=1 // pred_region
      %s14 = ssub.s32 256, 256
      %15 = vsyncadd [#allocation3], %s14
      %s17 = sshll.u32 [#allocation2], 4
      %s18 = int_to_ptr.vmem [resolvable:$true] %s17
      %20 = dma.hbm_to_vmem [thread:$0]  %s0, 256, %s18, [#allocation3]
    $region5: #{tpu_custom_call.1} parent=1 // pred_fallthru
      _
    // Predicated region
    $region6: #{tpu_custom_call.1} parent=1 // pred_check
      _
    $region7: #{tpu_custom_call.1} parent=1 // pred_check_branch
      %22 = sbr.rel (0) target = $region9
    $region8: #{tpu_custom_call.1} parent=1 // pred_region
      %s24 = ssub.s32 2048, 2048
      %25 = vsyncadd [#allocation6], %s24
      %s26 = sshll.u32 [#allocation5], 4
      %s27 = int_to_ptr.vmem [resolvable:$true] %s26
      %32 = dma.hbm_to_vmem [thread:$0]  %s1, 2048, %s27, [#allocation6], 128, 128, 8
    $region9: #{tpu_custom_call.1} parent=1 // pred_fallthru
      _
    // Predicated region
    $region10: #{tpu_custom_call.1} parent=1 // pred_check
      _
    $region11: #{tpu_custom_call.1} parent=1 // pred_check_branch
      %34 = sbr.rel (0) target = $region13
    $region12: #{tpu_custom_call.1} parent=1 // pred_region
      %s36 = ssub.s32 512, 512
      %37 = vsyncadd [#allocation6], %s36
      %s38 = sshll.u32 [#allocation7], 4
      %s39 = int_to_ptr.vmem [resolvable:$true] %s38
      %44 = dma.hbm_to_vmem [thread:$0]  %s2, 512, %s39, [#allocation6], 128, 128, 8
    $region13: #{tpu_custom_call.1} parent=1 // pred_fallthru
      _
    // Predicated region
    $region14: #{tpu_custom_call.1} parent=1 // pred_check
      _
    $region15: #{tpu_custom_call.1} parent=1 // pred_check_branch
      %46 = sbr.rel (0) target = $region17
    $region16: #{tpu_custom_call.1} parent=1 // pred_region
      %47 = dma.done [#allocation3], 256
    $region17: #{tpu_custom_call.1} parent=1 // pred_fallthru
      _
    // Predicated region
    $region18: #{tpu_custom_call.1} parent=1 // pred_check
      _
    $region19: #{tpu_custom_call.1} parent=1 // pred_check_branch
      %49 = sbr.rel (0) target = $region21
    $region20: #{tpu_custom_call.1} parent=1 // pred_region
      %50 = dma.done [#allocation6], 2048
    $region21: #{tpu_custom_call.1} parent=1 // pred_fallthru
      _
    // Predicated region
    $region22: #{tpu_custom_call.1} parent=1 // pred_check
      _
    $region23: #{tpu_custom_call.1} parent=1 // pred_check_branch
      %52 = sbr.rel (0) target = $region25
    $region24: #{tpu_custom_call.1} parent=1 // pred_region
      %53 = dma.done [#allocation6], 512
    $region25: #{tpu_custom_call.1} parent=1 // pred_fallthru
      _
    %v54 = vld [vmem:[#allocation7] sm:$0xff]
    %v55 = vld [vmem:[#allocation7 + $0x8] sm:$0xff]
    %v56 = vld [vmem:[#allocation7 + $0x10] sm:$0xff]
    %v57 = vld [vmem:[#allocation7 + $0x18] sm:$0xff]
    %v58 = vld [vmem:[#allocation2] ss:$0 sm:$0xff]
    %v59 = vld [vmem:[#allocation5] sm:$0xff]
    %v60 = vld [vmem:[#allocation5 + $0x8] sm:$0xff]
    %v61 = vld [vmem:[#allocation5 + $0x10] sm:$0xff]
    %v62 = vld [vmem:[#allocation5 + $0x18] sm:$0xff]
    %v63 = vmul.f32 %v59, %v58
    %v64 = vmul.f32 %v60, %v58
    %v65 = vmul.f32 %v61, %v58
    %v66 = vmul.f32 %v62, %v58
    %v67 = vadd.f32 %v54, %v63
    %v68 = vadd.f32 %v55, %v64
    %v69 = vadd.f32 %v56, %v65
    %v70 = vadd.f32 %v57, %v66
    %v71 = vld [vmem:[#allocation2 + $0x1] ss:$0 sm:$0xff]
    %s72 = scalar_lea.vmem [#allocation5], 32
    %v73 = vld [vmem:[%s72] sm:$0xff]
    %v74 = vld [vmem:[%s72 + $0x8] sm:$0xff]
    %v75 = vld [vmem:[%s72 + $0x10] sm:$0xff]
    %v76 = vld [vmem:[%s72 + $0x18] sm:$0xff]
    %v77 = vmul.f32 %v73, %v71
    %v78 = vmul.f32 %v74, %v71
    %v79 = vmul.f32 %v75, %v71
    %v80 = vmul.f32 %v76, %v71
    %v81 = vadd.f32 %v67, %v77
    %v82 = vadd.f32 %v68, %v78
    %v83 = vadd.f32 %v69, %v79
    %v84 = vadd.f32 %v70, %v80
    %v85 = vld [vmem:[#allocation2 + $0x2] ss:$0 sm:$0xff]
    %s86 = scalar_lea.vmem [#allocation5], 64
    %v87 = vld [vmem:[%s86] sm:$0xff]
    %v88 = vld [vmem:[%s86 + $0x8] sm:$0xff]
    %v89 = vld [vmem:[%s86 + $0x10] sm:$0xff]
    %v90 = vld [vmem:[%s86 + $0x18] sm:$0xff]
    %v91 = vmul.f32 %v87, %v85
    %v92 = vmul.f32 %v88, %v85
    %v93 = vmul.f32 %v89, %v85
    %v94 = vmul.f32 %v90, %v85
    %v95 = vadd.f32 %v81, %v91
    %v96 = vadd.f32 %v82, %v92
    %v97 = vadd.f32 %v83, %v93
    %v98 = vadd.f32 %v84, %v94
    %v99 = vld [vmem:[#allocation2 + $0x3] ss:$0 sm:$0xff]
    %s100 = scalar_lea.vmem [#allocation5], 96
    %v101 = vld [vmem:[%s100] sm:$0xff]
    %v102 = vld [vmem:[%s100 + $0x8] sm:$0xff]
    %v103 = vld [vmem:[%s100 + $0x10] sm:$0xff]
    %v104 = vld [vmem:[%s100 + $0x18] sm:$0xff]
    %v105 = vmul.f32 %v101, %v99
    %v106 = vmul.f32 %v102, %v99
    %v107 = vmul.f32 %v103, %v99
    %v108 = vmul.f32 %v104, %v99
    %v109 = vadd.f32 %v95, %v105
    %v110 = vadd.f32 %v96, %v106
    %v111 = vadd.f32 %v97, %v107
    %v112 = vadd.f32 %v98, %v108
    %v113 = vmax.f32 %v109, 0.0
    %v114 = vmax.f32 %v110, 0.0
    %v115 = vmax.f32 %v111, 0.0
    %v116 = vmax.f32 %v112, 0.0
    %117 = vadd.xlane.f32.xlu0 %v113
    %v118 = vpop.xlane.xlu0 %117
    %119 = vadd.xlane.f32.xlu0 %v114
    %v120 = vpop.xlane.xlu0 %119
    %121 = vadd.xlane.f32.xlu0 %v115
    %v122 = vpop.xlane.xlu0 %121
    %123 = vadd.xlane.f32.xlu0 %v116
    %v124 = vpop.xlane.xlu0 %123
    %v125 = vadd.f32 %v118, 0.0
    %v126 = vadd.f32 %v120, 0.0
    %v127 = vadd.f32 %v122, 0.0
    %v128 = vadd.f32 %v124, 0.0
    %v129 = vld [vmem:[#allocation2 + $0x8] ss:$0 sm:$0xff]
    %v130 = vmul.f32 %v59, %v129
    %v131 = vmul.f32 %v60, %v129
    %v132 = vmul.f32 %v61, %v129
    %v133 = vmul.f32 %v62, %v129
    %v134 = vadd.f32 %v54, %v130
    %v135 = vadd.f32 %v55, %v131
    %v136 = vadd.f32 %v56, %v132
    %v137 = vadd.f32 %v57, %v133
    %v138 = vld [vmem:[#allocation2 + $0x9] ss:$0 sm:$0xff]
    %v139 = vmul.f32 %v73, %v138
    %v140 = vmul.f32 %v74, %v138
    %v141 = vmul.f32 %v75, %v138
    %v142 = vmul.f32 %v76, %v138
    %v143 = vadd.f32 %v134, %v139
    %v144 = vadd.f32 %v135, %v140
    %v145 = vadd.f32 %v136, %v141
    %v146 = vadd.f32 %v137, %v142
    %v147 = vld [vmem:[#allocation2 + $0xa] ss:$0 sm:$0xff]
    %v148 = vmul.f32 %v87, %v147
    %v149 = vmul.f32 %v88, %v147
    %v150 = vmul.f32 %v89, %v147
    %v151 = vmul.f32 %v90, %v147
    %v152 = vadd.f32 %v143, %v148
    %v153 = vadd.f32 %v144, %v149
    %v154 = vadd.f32 %v145, %v150
    %v155 = vadd.f32 %v146, %v151
    %v156 = vld [vmem:[#allocation2 + $0xb] ss:$0 sm:$0xff]
    %v157 = vmul.f32 %v101, %v156
    %v158 = vmul.f32 %v102, %v156
    %v159 = vmul.f32 %v103, %v156
    %v160 = vmul.f32 %v104, %v156
    %v161 = vadd.f32 %v152, %v157
    %v162 = vadd.f32 %v153, %v158
    %v163 = vadd.f32 %v154, %v159
    %v164 = vadd.f32 %v155, %v160
    %v165 = vmax.f32 %v161, 0.0
    %v166 = vmax.f32 %v162, 0.0
    %v167 = vmax.f32 %v163, 0.0
    %v168 = vmax.f32 %v164, 0.0
    %169 = vadd.xlane.f32.xlu0 %v165
    %v170 = vpop.xlane.xlu0 %169
    %171 = vadd.xlane.f32.xlu0 %v166
    %v172 = vpop.xlane.xlu0 %171
    %173 = vadd.xlane.f32.xlu0 %v167
    %v174 = vpop.xlane.xlu0 %173
    %175 = vadd.xlane.f32.xlu0 %v168
    %v176 = vpop.xlane.xlu0 %175
    %v177 = vadd.f32 %v125, %v170
    %v178 = vadd.f32 %v126, %v172
    %v179 = vadd.f32 %v127, %v174
    %v180 = vadd.f32 %v128, %v176
    %v181 = vmul.f32 %v177, 0.00390625
    %v182 = vmul.f32 %v178, 0.00390625
    %v183 = vmul.f32 %v179, 0.00390625
    %v184 = vmul.f32 %v180, 0.00390625
    %v189 = vlaneseq
    %v190 = vand.u32 %v189, 127
    %v191 = vlaneseq
    %v192 = vshrl.u32 %v191, 7
    %v193 = vsub.s32 %v190, %v192
    %v194 = vrot.slane %v181, %v193
    %v195 = vadd.s32 %v190, 4294967288
    %v196 = vlaneseq
    %v197 = vshrl.u32 %v196, 7
    %v198 = vsub.s32 %v195, %v197
    %v199 = vrot.slane %v182, %v198
    %vm200 = vcmask 130112
    %v201 = vsel %vm200, %v199, %v194
    %v202 = vadd.s32 %v190, 4294967280
    %v203 = vlaneseq
    %v204 = vshrl.u32 %v203, 7
    %v205 = vsub.s32 %v202, %v204
    %v206 = vrot.slane %v183, %v205
    %vm207 = vcmask 195712
    %v208 = vsel %vm207, %v206, %v201
    %v209 = vadd.s32 %v190, 4294967272
    %v210 = vlaneseq
    %v211 = vshrl.u32 %v210, 7
    %v212 = vsub.s32 %v209, %v211
    %v213 = vrot.slane %v184, %v212
    %vm214 = vcmask 261312
    %v215 = vsel %vm214, %v213, %v208
    %vm217 = vcmask 253952
    %218 = vst.msk [vmem:[#allocation8] sm:$0x1] %vm217, %v215
    %v219 = vld [vmem:[#allocation7] sm:$0xff]
    %v220 = vld [vmem:[#allocation7 + $0x8] sm:$0xff]
    %v221 = vld [vmem:[#allocation7 + $0x10] sm:$0xff]
    %v222 = vld [vmem:[#allocation7 + $0x18] sm:$0xff]
    %v223 = vld [vmem:[#allocation2 + $0x4] ss:$0 sm:$0xff]
    %v224 = vld [vmem:[#allocation5] sm:$0xff]
    %v225 = vld [vmem:[#allocation5 + $0x8] sm:$0xff]
    %v226 = vld [vmem:[#allocation5 + $0x10] sm:$0xff]
    %v227 = vld [vmem:[#allocation5 + $0x18] sm:$0xff]
    %v228 = vmul.f32 %v224, %v223
    %v229 = vmul.f32 %v225, %v223
    %v230 = vmul.f32 %v226, %v223
    %v231 = vmul.f32 %v227, %v223
    %v232 = vadd.f32 %v219, %v228
    %v233 = vadd.f32 %v220, %v229
    %v234 = vadd.f32 %v221, %v230
    %v235 = vadd.f32 %v222, %v231
    %v236 = vld [vmem:[#allocation2 + $0x5] ss:$0 sm:$0xff]
    %v237 = vld [vmem:[%s72] sm:$0xff]
    %v238 = vld [vmem:[%s72 + $0x8] sm:$0xff]
    %v239 = vld [vmem:[%s72 + $0x10] sm:$0xff]
    %v240 = vld [vmem:[%s72 + $0x18] sm:$0xff]
    %v241 = vmul.f32 %v237, %v236
    %v242 = vmul.f32 %v238, %v236
    %v243 = vmul.f32 %v239, %v236
    %v244 = vmul.f32 %v240, %v236
    %v245 = vadd.f32 %v232, %v241
    %v246 = vadd.f32 %v233, %v242
    %v247 = vadd.f32 %v234, %v243
    %v248 = vadd.f32 %v235, %v244
    %v249 = vld [vmem:[#allocation2 + $0x6] ss:$0 sm:$0xff]
    %v250 = vld [vmem:[%s86] sm:$0xff]
    %v251 = vld [vmem:[%s86 + $0x8] sm:$0xff]
    %v252 = vld [vmem:[%s86 + $0x10] sm:$0xff]
    %v253 = vld [vmem:[%s86 + $0x18] sm:$0xff]
    %v254 = vmul.f32 %v250, %v249
    %v255 = vmul.f32 %v251, %v249
    %v256 = vmul.f32 %v252, %v249
    %v257 = vmul.f32 %v253, %v249
    %v258 = vadd.f32 %v245, %v254
    %v259 = vadd.f32 %v246, %v255
    %v260 = vadd.f32 %v247, %v256
    %v261 = vadd.f32 %v248, %v257
    %v262 = vld [vmem:[#allocation2 + $0x7] ss:$0 sm:$0xff]
    %v263 = vld [vmem:[%s100] sm:$0xff]
    %v264 = vld [vmem:[%s100 + $0x8] sm:$0xff]
    %v265 = vld [vmem:[%s100 + $0x10] sm:$0xff]
    %v266 = vld [vmem:[%s100 + $0x18] sm:$0xff]
    %v267 = vmul.f32 %v263, %v262
    %v268 = vmul.f32 %v264, %v262
    %v269 = vmul.f32 %v265, %v262
    %v270 = vmul.f32 %v266, %v262
    %v271 = vadd.f32 %v258, %v267
    %v272 = vadd.f32 %v259, %v268
    %v273 = vadd.f32 %v260, %v269
    %v274 = vadd.f32 %v261, %v270
    %v275 = vmax.f32 %v271, 0.0
    %v276 = vmax.f32 %v272, 0.0
    %v277 = vmax.f32 %v273, 0.0
    %v278 = vmax.f32 %v274, 0.0
    %279 = vadd.xlane.f32.xlu0 %v275
    %v280 = vpop.xlane.xlu0 %279
    %281 = vadd.xlane.f32.xlu0 %v276
    %v282 = vpop.xlane.xlu0 %281
    %283 = vadd.xlane.f32.xlu0 %v277
    %v284 = vpop.xlane.xlu0 %283
    %285 = vadd.xlane.f32.xlu0 %v278
    %v286 = vpop.xlane.xlu0 %285
    %v287 = vadd.f32 %v280, 0.0
    %v288 = vadd.f32 %v282, 0.0
    %v289 = vadd.f32 %v284, 0.0
    %v290 = vadd.f32 %v286, 0.0
    %v291 = vld [vmem:[#allocation2 + $0xc] ss:$0 sm:$0xff]
    %v292 = vmul.f32 %v224, %v291
    %v293 = vmul.f32 %v225, %v291
    %v294 = vmul.f32 %v226, %v291
    %v295 = vmul.f32 %v227, %v291
    %v296 = vadd.f32 %v219, %v292
    %v297 = vadd.f32 %v220, %v293
    %v298 = vadd.f32 %v221, %v294
    %v299 = vadd.f32 %v222, %v295
    %v300 = vld [vmem:[#allocation2 + $0xd] ss:$0 sm:$0xff]
    %v301 = vmul.f32 %v237, %v300
    %v302 = vmul.f32 %v238, %v300
    %v303 = vmul.f32 %v239, %v300
    %v304 = vmul.f32 %v240, %v300
    %v305 = vadd.f32 %v296, %v301
    %v306 = vadd.f32 %v297, %v302
    %v307 = vadd.f32 %v298, %v303
    %v308 = vadd.f32 %v299, %v304
    %v309 = vld [vmem:[#allocation2 + $0xe] ss:$0 sm:$0xff]
    %v310 = vmul.f32 %v250, %v309
    %v311 = vmul.f32 %v251, %v309
    %v312 = vmul.f32 %v252, %v309
    %v313 = vmul.f32 %v253, %v309
    %v314 = vadd.f32 %v305, %v310
    %v315 = vadd.f32 %v306, %v311
    %v316 = vadd.f32 %v307, %v312
    %v317 = vadd.f32 %v308, %v313
    %v318 = vld [vmem:[#allocation2 + $0xf] ss:$0 sm:$0xff]
    %v319 = vmul.f32 %v263, %v318
    %v320 = vmul.f32 %v264, %v318
    %v321 = vmul.f32 %v265, %v318
    %v322 = vmul.f32 %v266, %v318
    %v323 = vadd.f32 %v314, %v319
    %v324 = vadd.f32 %v315, %v320
    %v325 = vadd.f32 %v316, %v321
    %v326 = vadd.f32 %v317, %v322
    %v327 = vmax.f32 %v323, 0.0
    %v328 = vmax.f32 %v324, 0.0
    %v329 = vmax.f32 %v325, 0.0
    %v330 = vmax.f32 %v326, 0.0
    %331 = vadd.xlane.f32.xlu0 %v327
    %v332 = vpop.xlane.xlu0 %331
    %333 = vadd.xlane.f32.xlu0 %v328
    %v334 = vpop.xlane.xlu0 %333
    %335 = vadd.xlane.f32.xlu0 %v329
    %v336 = vpop.xlane.xlu0 %335
    %337 = vadd.xlane.f32.xlu0 %v330
    %v338 = vpop.xlane.xlu0 %337
    %v339 = vadd.f32 %v287, %v332
    %v340 = vadd.f32 %v288, %v334
    %v341 = vadd.f32 %v289, %v336
    %v342 = vadd.f32 %v290, %v338
    %v343 = vmul.f32 %v339, 0.00390625
    %v344 = vmul.f32 %v340, 0.00390625
    %v345 = vmul.f32 %v341, 0.00390625
    %v346 = vmul.f32 %v342, 0.00390625
    %v351 = vlaneseq
    %v352 = vshrl.u32 %v351, 7
    %v353 = vsub.s32 %v190, %v352
    %v354 = vrot.slane %v343, %v353
    %v355 = vlaneseq
    %v356 = vshrl.u32 %v355, 7
    %v357 = vsub.s32 %v195, %v356
    %v358 = vrot.slane %v344, %v357
    %v359 = vsel %vm200, %v358, %v354
    %v360 = vlaneseq
    %v361 = vshrl.u32 %v360, 7
    %v362 = vsub.s32 %v202, %v361
    %v363 = vrot.slane %v345, %v362
    %v364 = vsel %vm207, %v363, %v359
    %v365 = vlaneseq
    %v366 = vshrl.u32 %v365, 7
    %v367 = vsub.s32 %v209, %v366
    %v368 = vrot.slane %v346, %v367
    %v369 = vsel %vm214, %v368, %v364
    %371 = vst.msk [vmem:[#allocation8 + $0x1] sm:$0x1] %vm217, %v369
    // Predicated region
    $region26: #{tpu_custom_call.1} parent=1 // pred_check
      _
    $region27: #{tpu_custom_call.1} parent=1 // pred_check_branch
      %373 = sbr.rel (0) target = $region29
    $region28: #{tpu_custom_call.1} parent=1 // pred_region
      %s375 = ssub.s32 32, 32
      %376 = vsyncadd [#allocation4], %s375
      %s378 = sshll.u32 [#allocation8], 4
      %s379 = int_to_ptr.vmem [resolvable:$true] %s378
      %381 = dma.vmem_to_hbm [thread:$0]  %s379, 32, %s3, [#allocation4]
    $region29: #{tpu_custom_call.1} parent=1 // pred_fallthru
      _
    // Predicated region
    $region30: #{tpu_custom_call.1} parent=1 // pred_check
      _
    $region31: #{tpu_custom_call.1} parent=1 // pred_check_branch
      %383 = sbr.rel (0) target = $region33
    $region32: #{tpu_custom_call.1} parent=1 // pred_region
      %384 = dma.done [#allocation4], 32
    $region33: #{tpu_custom_call.1} parent=1 // pred_fallthru
      _
    %385 = vsyncpa [#allocation3], 1
    %386 = vsyncpa [#allocation6], 1
    %387 = vsyncpa [#allocation4], 1

</llo_original>
